<compile_context>
chip_gen: v7x
topology: tpu7x:2x2x1
jax: 0.10.0
libtpu: 0.0.40
codegen_flags: <defaults>
</compile_context>

<pallas_src>
import functools

import jax
import jax.numpy as jnp
from jax.experimental import pallas as pl
from jax.experimental.pallas import tpu as pltpu

LANE = 128
SUBLANE = 8
NUM_CORES = 2          # leading "parallel" grid axis (uses both TCs on v7x)
CHUNK_ROWS = 512       # in-kernel chunk: 512x128 f32 = 256 KiB per temporary


def _dice_bce_kernel(x_ref, t_ref, inter_ref, sump_ref, sumt_ref, bce_ref, *,
                     tile_rows, chunk, blocks_per_core, num_row_blocks,
                     total_rows, total_blocks):
    c = pl.program_id(0)      # core index      ("parallel")
    i = pl.program_id(1)      # row-block index ("arbitrary")

    @pl.when(i == 0)
    def _init():
        inter_ref[...] = jnp.zeros_like(inter_ref)
        sump_ref[...] = jnp.zeros_like(sump_ref)
        sumt_ref[...] = jnp.zeros_like(sumt_ref)
        bce_ref[...] = jnp.zeros_like(bce_ref)

    blk = c * blocks_per_core + i          # logical (unclamped) row-block id
    nchunks = tile_rows // chunk

    def fold(v):
        # (chunk, 128) -> (8, 128): tile-aligned sublane split reduced with
        # pure elementwise (VPU) adds; the cross-lane reduce happens once, in
        # the wrapper, on tiny arrays.
        return jnp.sum(v.reshape(-1, SUBLANE, LANE), axis=0)

    def accumulate(masked):
        # rows of this block holding real data (<= 0 for phantom blocks)
        rows_valid = total_rows - blk * tile_rows

        def body(ci, carry):
            r0 = pl.multiple_of(ci * chunk, chunk)
            x = x_ref[pl.ds(r0, chunk), :].astype(jnp.float32)
            t = t_ref[pl.ds(r0, chunk), :].astype(jnp.float32)
            # One exp(-|x|) feeds both sigmoid and softplus:
            #   p   = sigmoid(x)  = where(x>=0, 1, e) / (1 + e)
            #   bce = softplus(x) - t*x = max(x, 0) + log1p(e) - t*x
            e = jnp.exp(-jnp.abs(x))
            p = jnp.where(x >= 0, jnp.float32(1.0), e) * pl.reciprocal(
                1.0 + e, approx=True)
            bce = jnp.maximum(x, jnp.float32(0.0)) + jnp.log1p(e) - t * x
            if masked:
                # Edge/phantom block: data past the real rows is stale, so
                # mask p, t AND bce (row-level compare -> no i32 overflow).
                row = r0 + jax.lax.broadcasted_iota(jnp.int32, (chunk, 1), 0)
                ok = row < rows_valid
                p = jnp.where(ok, p, 0.0)
                t = jnp.where(ok, t, 0.0)
                bce = jnp.where(ok, bce, 0.0)
            inter_ref[0] += fold(p * t)
            sump_ref[0] += fold(p)
            sumt_ref[0] += fold(t)
            bce_ref[0] += fold(bce)
            return carry

        jax.lax.fori_loop(0, nchunks, body, 0)

    # Only blocks at/after `first_masked` can contain invalid rows.
    if total_rows % tile_rows != 0:
        first_masked = num_row_blocks - 1
    else:
        first_masked = num_row_blocks

    if first_masked >= total_blocks:          # every grid block is full
        accumulate(False)
    elif first_masked <= 0:                   # every grid block is ragged
        accumulate(True)
    else:
        @pl.when(blk < first_masked)
        def _steady():
            accumulate(False)

        @pl.when(blk >= first_masked)
        def _edge():
            accumulate(True)


def dice_bce_loss(inputs, targets, smooth=1.0, tile_rows=4096):
    """Pallas implementation of DiceBCELoss.forward (returns an f32 scalar)."""
    x = inputs.reshape(-1)      # keep native dtype; cast to f32 in-kernel
    t = targets.reshape(-1)
    n = x.shape[0]
    if n == 0:
        raise ValueError("DiceBCELoss requires at least one element")

    rows = n // LANE
    head = rows * LANE
    tail = n - head

    inter = jnp.float32(0.0)
    sum_p = jnp.float32(0.0)
    sum_t = jnp.float32(0.0)
    bce_sum = jnp.float32(0.0)

    if rows > 0:
        # No pad / no copy on the 128-aligned prefix (view-only reshapes).
        xh = (x if tail == 0 else x[:head]).reshape(rows, LANE)
        th = (t if tail == 0 else t[:head]).reshape(rows, LANE)

        ch = min(CHUNK_ROWS, -(-rows // SUBLANE) * SUBLANE)
        tr = min(int(tile_rows), -(-rows // ch) * ch)
        tr = -(-tr // ch) * ch                  # block rows: multiple of chunk
        num_blocks = -(-rows // tr)
        cores = min(NUM_CORES, num_blocks)
        bpc = -(-num_blocks // cores)           # row-blocks per core
        total_blocks = cores * bpc

        if total_blocks == num_blocks:          # no phantom blocks
            in_map = lambda c, i: (c * bpc + i, 0)
        else:
            # Clamp phantom blocks (last core only) onto the last real block;
            # the kernel masks their contribution to zero.
            in_map = lambda c, i: (jnp.minimum(c * bpc + i, num_blocks - 1), 0)

        kernel = functools.partial(
            _dice_bce_kernel, tile_rows=tr, chunk=ch, blocks_per_core=bpc,
            num_row_blocks=num_blocks, total_rows=rows,
            total_blocks=total_blocks)

        row_spec = pl.BlockSpec((tr, LANE), in_map)
        acc_spec = pl.BlockSpec((1, SUBLANE, LANE), lambda c, i: (c, 0, 0))
        acc_shape = jax.ShapeDtypeStruct((cores, SUBLANE, LANE), jnp.float32)

        cost = pl.CostEstimate(
            flops=14 * head,
            transcendentals=2 * head,
            bytes_accessed=head * (x.dtype.itemsize + t.dtype.itemsize)
            + 4 * cores * SUBLANE * LANE * 4)

        parts = pl.pallas_call(
            kernel,
            out_shape=(acc_shape,) * 4,
            grid_spec=pltpu.PrefetchScalarGridSpec(
                num_scalar_prefetch=0,
                grid=(cores, bpc),
                in_specs=[row_spec, row_spec],
                out_specs=(acc_spec,) * 4,
            ),
            compiler_params=pltpu.CompilerParams(
                dimension_semantics=("parallel", "arbitrary"),
                vmem_limit_bytes=32 * 1024 * 1024),
            cost_estimate=cost,
        )(xh, th)
        # TODO(synk): per-generation tuning (tile_rows=8192 and
        # pipeline_mode=pl.Buffered(3) on row_spec for v7x) would add a few
        # percent; kept one portable setting that fits v5e's scoped VMEM.
        inter = inter + jnp.sum(parts[0])
        sum_p = sum_p + jnp.sum(parts[1])
        sum_t = sum_t + jnp.sum(parts[2])
        bce_sum = bce_sum + jnp.sum(parts[3])

    if tail:
        # < 128-element remainder folded in plain jnp instead of padding and
        # copying the whole tensor through HBM.
        xt = x[head:].astype(jnp.float32)
        tt = t[head:].astype(jnp.float32)
        e = jnp.exp(-jnp.abs(xt))
        p = jnp.where(xt >= 0, 1.0, e) / (1.0 + e)
        inter = inter + jnp.sum(p * tt)
        sum_p = sum_p + jnp.sum(p)
        sum_t = sum_t + jnp.sum(tt)
        bce_sum = bce_sum + jnp.sum(jnp.maximum(xt, 0.0) + jnp.log1p(e)
                                    - tt * xt)

    smooth = jnp.float32(smooth)
    dice_loss = 1.0 - (2.0 * inter + smooth) / (sum_p + sum_t + smooth)
    bce_mean = bce_sum / jnp.float32(n)
    return bce_mean + dice_loss


def _reference(inputs, targets, smooth=1.0):
    p = jax.nn.sigmoid(inputs.reshape(-1).astype(jnp.float32))
    t = targets.reshape(-1).astype(jnp.float32)
    inter = jnp.sum(p * t)
    dice = 1.0 - (2.0 * inter + smooth) / (jnp.sum(p) + jnp.sum(t) + smooth)
    eps = 1e-12
    bce = -jnp.mean(t * jnp.log(p + eps) + (1.0 - t) * jnp.log(1.0 - p + eps))
    return bce + dice


if __name__ == "__main__":
    key = jax.random.PRNGKey(0)
    k1, k2 = jax.random.split(key)
    # NCHW-like logits and binary targets, as the torch module would see.
    x = jax.random.normal(k1, (2, 4, 16, 16), dtype=jnp.float32)
    tgt = (jax.random.uniform(k2, (2, 4, 16, 16)) > 0.5).astype(jnp.float32)

    loss = jax.block_until_ready(dice_bce_loss(x, tgt, smooth=1.0))
    ref = _reference(x, tgt, smooth=1.0)
    assert jnp.isfinite(loss)
    assert abs(float(loss) - float(ref)) < 1e-3, (float(loss), float(ref))
    print("KERNEL_OK")
</pallas_src>

<mosaic_0001>
module attributes {stable_mosaic.version = 11 : i64} {
  func.func @_dice_bce_kernel(%arg0: i32, %arg1: i32, %arg2: memref<16x128xf32, #tpu.memory_space<vmem>>, %arg3: memref<16x128xf32, #tpu.memory_space<vmem>>, %arg4: memref<1x8x128xf32, #tpu.memory_space<vmem>>, %arg5: memref<1x8x128xf32, #tpu.memory_space<vmem>>, %arg6: memref<1x8x128xf32, #tpu.memory_space<vmem>>, %arg7: memref<1x8x128xf32, #tpu.memory_space<vmem>>) attributes {dimension_semantics = [#tpu.dimension_semantics<parallel>, #tpu.dimension_semantics<arbitrary>], iteration_bounds = array<i64: 1, 1>, scalar_prefetch = 0 : i64, scratch_operands = 0 : i64, tpu.core_type = #tpu.core_type<tc>, window_params = [{transform_indices = @transform_0, window_bounds = array<i64: 16, 128>}, {transform_indices = @transform_1, window_bounds = array<i64: 16, 128>}, {transform_indices = @transform_2, window_bounds = array<i64: 1, 8, 128>}, {transform_indices = @transform_3, window_bounds = array<i64: 1, 8, 128>}, {transform_indices = @transform_4, window_bounds = array<i64: 1, 8, 128>}, {transform_indices = @transform_5, window_bounds = array<i64: 1, 8, 128>}]} {
    %c0_i32 = arith.constant 0 : i32
    %0 = arith.cmpi eq, %arg1, %c0_i32 : i32
    %1 = arith.extui %0 : i1 to i32
    %c0_i32_0 = arith.constant 0 : i32
    %2 = arith.cmpi ne, %1, %c0_i32_0 : i32
    scf.if %2 {
      %cst_35 = arith.constant 0.000000e+00 : f32
      %60 = vector.broadcast %cst_35 : f32 to vector<1x8x128xf32>
      %c0_36 = arith.constant 0 : index
      %c0_37 = arith.constant 0 : index
      %c0_38 = arith.constant 0 : index
      %61 = vector.load %arg4[%c0_36, %c0_37, %c0_38] : memref<1x8x128xf32, #tpu.memory_space<vmem>>, vector<1x8x128xf32>
      tpu.vector_store %arg4[%c0_36, %c0_37, %c0_38], %60 {strides = array<i32>} : memref<1x8x128xf32, #tpu.memory_space<vmem>>, vector<1x8x128xf32>,
      %cst_39 = arith.constant 0.000000e+00 : f32
      %62 = vector.broadcast %cst_39 : f32 to vector<1x8x128xf32>
      %c0_40 = arith.constant 0 : index
      %c0_41 = arith.constant 0 : index
      %c0_42 = arith.constant 0 : index
      %63 = vector.load %arg5[%c0_40, %c0_41, %c0_42] : memref<1x8x128xf32, #tpu.memory_space<vmem>>, vector<1x8x128xf32>
      tpu.vector_store %arg5[%c0_40, %c0_41, %c0_42], %62 {strides = array<i32>} : memref<1x8x128xf32, #tpu.memory_space<vmem>>, vector<1x8x128xf32>,
      %cst_43 = arith.constant 0.000000e+00 : f32
      %64 = vector.broadcast %cst_43 : f32 to vector<1x8x128xf32>
      %c0_44 = arith.constant 0 : index
      %c0_45 = arith.constant 0 : index
      %c0_46 = arith.constant 0 : index
      %65 = vector.load %arg6[%c0_44, %c0_45, %c0_46] : memref<1x8x128xf32, #tpu.memory_space<vmem>>, vector<1x8x128xf32>
      tpu.vector_store %arg6[%c0_44, %c0_45, %c0_46], %64 {strides = array<i32>} : memref<1x8x128xf32, #tpu.memory_space<vmem>>, vector<1x8x128xf32>,
      %cst_47 = arith.constant 0.000000e+00 : f32
      %66 = vector.broadcast %cst_47 : f32 to vector<1x8x128xf32>
      %c0_48 = arith.constant 0 : index
      %c0_49 = arith.constant 0 : index
      %c0_50 = arith.constant 0 : index
      %67 = vector.load %arg7[%c0_48, %c0_49, %c0_50] : memref<1x8x128xf32, #tpu.memory_space<vmem>>, vector<1x8x128xf32>
      tpu.vector_store %arg7[%c0_48, %c0_49, %c0_50], %66 {strides = array<i32>} : memref<1x8x128xf32, #tpu.memory_space<vmem>>, vector<1x8x128xf32>,
    } else {
    }
    %c0_i32_1 = arith.constant 0 : i32
    %c16_i32 = arith.constant 16 : i32
    %3 = arith.muli %c0_i32_1, %c16_i32 : i32
    %4 = tpu.assume_multiple %3, 16 : i32
    %5 = arith.index_cast %4 : i32 to index
    %c0 = arith.constant 0 : index
    %6 = vector.load %arg2[%5, %c0] : memref<16x128xf32, #tpu.memory_space<vmem>>, vector<16x128xf32>
    %7 = arith.index_cast %4 : i32 to index
    %c0_2 = arith.constant 0 : index
    %8 = vector.load %arg3[%7, %c0_2] : memref<16x128xf32, #tpu.memory_space<vmem>>, vector<16x128xf32>
    %9 = math.absf %6 : vector<16x128xf32>
    %cst = arith.constant 0.000000e+00 : f32
    %10 = vector.broadcast %cst : f32 to vector<16x128xf32>
    %11 = arith.subf %10, %9 : vector<16x128xf32>
    %12 = math.exp %11 : vector<16x128xf32>
    %cst_3 = arith.constant 0.000000e+00 : f32
    %13 = vector.broadcast %cst_3 : f32 to vector<16x128xf32>
    %14 = arith.cmpf oge, %6, %13 : vector<16x128xf32>
    %cst_4 = arith.constant 1.000000e+00 : f32
    %15 = vector.broadcast %cst_4 : f32 to vector<16x128xf32>
    %16 = arith.select %14, %15, %12 : vector<16x128xi1>, vector<16x128xf32>
    %cst_5 = arith.constant 1.000000e+00 : f32
    %17 = vector.broadcast %cst_5 : f32 to vector<16x128xf32>
    %18 = arith.addf %17, %12 : vector<16x128xf32>
    %19 = tpu.reciprocal %18 {approx = true} : vector<16x128xf32> -> vector<16x128xf32>
    %20 = arith.mulf %16, %19 : vector<16x128xf32>
    %cst_6 = arith.constant 0.000000e+00 : f32
    %21 = vector.broadcast %cst_6 : f32 to vector<16x128xf32>
    %22 = arith.maximumf %6, %21 : vector<16x128xf32>
    %23 = math.log1p %12 : vector<16x128xf32>
    %24 = arith.addf %22, %23 : vector<16x128xf32>
    %25 = arith.mulf %8, %6 : vector<16x128xf32>
    %26 = arith.subf %24, %25 : vector<16x128xf32>
    %c0_7 = arith.constant 0 : index
    %c0_8 = arith.constant 0 : index
    %c0_9 = arith.constant 0 : index
    %27 = vector.load %arg4[%c0_7, %c0_8, %c0_9] : memref<1x8x128xf32, #tpu.memory_space<vmem>>, vector<1x8x128xf32>
    %28 = vector.shape_cast %27 : vector<1x8x128xf32> to vector<8x128xf32>
    %29 = arith.mulf %20, %8 : vector<16x128xf32>
    %30 = vector.shape_cast %29 : vector<16x128xf32> to vector<2x8x128xf32>
    %cst_10 = arith.constant dense<0.000000e+00> : vector<8x128xf32>
    %31 = vector.multi_reduction <add>, %30, %cst_10 [0] : vector<2x8x128xf32> to vector<8x128xf32>
    %32 = arith.addf %28, %31 : vector<8x128xf32>
    %c0_11 = arith.constant 0 : index
    %c0_12 = arith.constant 0 : index
    %c0_13 = arith.constant 0 : index
    %33 = vector.load %arg4[%c0_11, %c0_12, %c0_13] : memref<1x8x128xf32, #tpu.memory_space<vmem>>, vector<1x8x128xf32>
    %34 = vector.shape_cast %33 : vector<1x8x128xf32> to vector<8x128xf32>
    %35 = vector.shape_cast %32 : vector<8x128xf32> to vector<1x8x128xf32>
    tpu.vector_store %arg4[%c0_11, %c0_12, %c0_13], %35 {strides = array<i32>} : memref<1x8x128xf32, #tpu.memory_space<vmem>>, vector<1x8x128xf32>,
    %c0_14 = arith.constant 0 : index
    %c0_15 = arith.constant 0 : index
    %c0_16 = arith.constant 0 : index
    %36 = vector.load %arg5[%c0_14, %c0_15, %c0_16] : memref<1x8x128xf32, #tpu.memory_space<vmem>>, vector<1x8x128xf32>
    %37 = vector.shape_cast %36 : vector<1x8x128xf32> to vector<8x128xf32>
    %38 = vector.shape_cast %20 : vector<16x128xf32> to vector<2x8x128xf32>
    %cst_17 = arith.constant dense<0.000000e+00> : vector<8x128xf32>
    %39 = vector.multi_reduction <add>, %38, %cst_17 [0] : vector<2x8x128xf32> to vector<8x128xf32>
    %40 = arith.addf %37, %39 : vector<8x128xf32>
    %c0_18 = arith.constant 0 : index
    %c0_19 = arith.constant 0 : index
    %c0_20 = arith.constant 0 : index
    %41 = vector.load %arg5[%c0_18, %c0_19, %c0_20] : memref<1x8x128xf32, #tpu.memory_space<vmem>>, vector<1x8x128xf32>
    %42 = vector.shape_cast %41 : vector<1x8x128xf32> to vector<8x128xf32>
    %43 = vector.shape_cast %40 : vector<8x128xf32> to vector<1x8x128xf32>
    tpu.vector_store %arg5[%c0_18, %c0_19, %c0_20], %43 {strides = array<i32>} : memref<1x8x128xf32, #tpu.memory_space<vmem>>, vector<1x8x128xf32>,
    %c0_21 = arith.constant 0 : index
    %c0_22 = arith.constant 0 : index
    %c0_23 = arith.constant 0 : index
    %44 = vector.load %arg6[%c0_21, %c0_22, %c0_23] : memref<1x8x128xf32, #tpu.memory_space<vmem>>, vector<1x8x128xf32>
    %45 = vector.shape_cast %44 : vector<1x8x128xf32> to vector<8x128xf32>
    %46 = vector.shape_cast %8 : vector<16x128xf32> to vector<2x8x128xf32>
    %cst_24 = arith.constant dense<0.000000e+00> : vector<8x128xf32>
    %47 = vector.multi_reduction <add>, %46, %cst_24 [0] : vector<2x8x128xf32> to vector<8x128xf32>
    %48 = arith.addf %45, %47 : vector<8x128xf32>
    %c0_25 = arith.constant 0 : index
    %c0_26 = arith.constant 0 : index
    %c0_27 = arith.constant 0 : index
    %49 = vector.load %arg6[%c0_25, %c0_26, %c0_27] : memref<1x8x128xf32, #tpu.memory_space<vmem>>, vector<1x8x128xf32>
    %50 = vector.shape_cast %49 : vector<1x8x128xf32> to vector<8x128xf32>
    %51 = vector.shape_cast %48 : vector<8x128xf32> to vector<1x8x128xf32>
    tpu.vector_store %arg6[%c0_25, %c0_26, %c0_27], %51 {strides = array<i32>} : memref<1x8x128xf32, #tpu.memory_space<vmem>>, vector<1x8x128xf32>,
    %c0_28 = arith.constant 0 : index
    %c0_29 = arith.constant 0 : index
    %c0_30 = arith.constant 0 : index
    %52 = vector.load %arg7[%c0_28, %c0_29, %c0_30] : memref<1x8x128xf32, #tpu.memory_space<vmem>>, vector<1x8x128xf32>
    %53 = vector.shape_cast %52 : vector<1x8x128xf32> to vector<8x128xf32>
    %54 = vector.shape_cast %26 : vector<16x128xf32> to vector<2x8x128xf32>
    %cst_31 = arith.constant dense<0.000000e+00> : vector<8x128xf32>
    %55 = vector.multi_reduction <add>, %54, %cst_31 [0] : vector<2x8x128xf32> to vector<8x128xf32>
    %56 = arith.addf %53, %55 : vector<8x128xf32>
    %c0_32 = arith.constant 0 : index
    %c0_33 = arith.constant 0 : index
    %c0_34 = arith.constant 0 : index
    %57 = vector.load %arg7[%c0_32, %c0_33, %c0_34] : memref<1x8x128xf32, #tpu.memory_space<vmem>>, vector<1x8x128xf32>
    %58 = vector.shape_cast %57 : vector<1x8x128xf32> to vector<8x128xf32>
    %59 = vector.shape_cast %56 : vector<8x128xf32> to vector<1x8x128xf32>
    tpu.vector_store %arg7[%c0_32, %c0_33, %c0_34], %59 {strides = array<i32>} : memref<1x8x128xf32, #tpu.memory_space<vmem>>, vector<1x8x128xf32>,
    %c1_i32 = arith.constant 1 : i32
    return
  }
  func.func @transform_0(%arg0: i32, %arg1: i32) -> (i32, i32) {
    %c1_i32 = arith.constant 1 : i32
    %0 = arith.muli %arg0, %c1_i32 : i32
    %1 = arith.addi %0, %arg1 : i32
    %c0_i32 = arith.constant 0 : i32
    %c0_i32_0 = arith.constant 0 : i32
    return %1, %c0_i32 : i32, i32
  }
  func.func @transform_1(%arg0: i32, %arg1: i32) -> (i32, i32) {
    %c1_i32 = arith.constant 1 : i32
    %0 = arith.muli %arg0, %c1_i32 : i32
    %1 = arith.addi %0, %arg1 : i32
    %c0_i32 = arith.constant 0 : i32
    %c0_i32_0 = arith.constant 0 : i32
    return %1, %c0_i32 : i32, i32
  }
  func.func @transform_2(%arg0: i32, %arg1: i32) -> (i32, i32, i32) {
    %c0_i32 = arith.constant 0 : i32
    %c0_i32_0 = arith.constant 0 : i32
    %c0_i32_1 = arith.constant 0 : i32
    return %arg0, %c0_i32, %c0_i32_0 : i32, i32, i32
  }
  func.func @transform_3(%arg0: i32, %arg1: i32) -> (i32, i32, i32) {
    %c0_i32 = arith.constant 0 : i32
    %c0_i32_0 = arith.constant 0 : i32
    %c0_i32_1 = arith.constant 0 : i32
    return %arg0, %c0_i32, %c0_i32_0 : i32, i32, i32
  }
  func.func @transform_4(%arg0: i32, %arg1: i32) -> (i32, i32, i32) {
    %c0_i32 = arith.constant 0 : i32
    %c0_i32_0 = arith.constant 0 : i32
    %c0_i32_1 = arith.constant 0 : i32
    return %arg0, %c0_i32, %c0_i32_0 : i32, i32, i32
  }
  func.func @transform_5(%arg0: i32, %arg1: i32) -> (i32, i32, i32) {
    %c0_i32 = arith.constant 0 : i32
    %c0_i32_0 = arith.constant 0 : i32
    %c0_i32_1 = arith.constant 0 : i32
    return %arg0, %c0_i32, %c0_i32_0 : i32, i32, i32
  }
}

</mosaic_0001>

<llo_original>
// kernel: tpu_custom_call.1
$region0: #{tpu_custom_call.1}
  #allocation0 [shape = 'u32[]', space=smem, size = 0x4, offset = 0x4, fixed_abs, tag = 'smem constant byte address 0x4 - core index']
  #allocation1 [shape = 'u32[144,128]{1,0:T(1,128)}', space=vmem, size = 0x12000, scoped, tag = 'internal scratch']
  %s0 = inlined_call_operand.hbm [shape: f32[16,128], index: 0, kind: input, shape index: {}]
  %s1 = inlined_call_operand.hbm [shape: f32[16,128], index: 1, kind: input, shape index: {}]
  %s2 = inlined_call_operand.hbm [shape: f32[1,8,128], index: 2, kind: output, shape index: {0}]
  %s3 = inlined_call_operand.hbm [shape: f32[1,8,128], index: 3, kind: output, shape index: {1}]
  %s4 = inlined_call_operand.hbm [shape: f32[1,8,128], index: 4, kind: output, shape index: {2}]
  %s5 = inlined_call_operand.hbm [shape: f32[1,8,128], index: 5, kind: output, shape index: {3}]
  %6 = xla_tuple %s2, %s3, %s4, %s5
  %s7 = sld [smem:[#allocation0]]
  $region54: #{tpu_custom_call.1} parent=0
    _
  %s9 = ssub.s32 1, %s7
  %s10 = scalar_select 0, %s9, %s7
  $region1: #{tpu_custom_call.1} parent=0
    #allocation2 [shape = 'u8[8192]{0}', space=vmem, size = 0x2000, scoped, tag = 'input window, operand 0, single buffered']
    #allocation3 [shape = 's32[1]{0}', space=sflag, size = 0x4, scoped, tag = 'scoped memory for tpu_custom_call.1']
    #allocation4 [shape = 's32[1]{0}', space=sflag, size = 0x4, scoped, tag = 'scoped memory for tpu_custom_call.1']
    #allocation5 [shape = 'u8[8192]{0}', space=vmem, size = 0x2000, scoped, tag = 'input window, operand 1, single buffered']
    #allocation6 [shape = 's32[1]{0}', space=sflag, size = 0x4, scoped, tag = 'scoped memory for tpu_custom_call.1']
    #allocation7 [shape = 'u8[4096]{0}', space=vmem, size = 0x1000, scoped, tag = 'output window, operand 0, single buffered']
    #allocation8 [shape = 'u8[4096]{0}', space=vmem, size = 0x1000, scoped, tag = 'output window, operand 1, single buffered']
    #allocation9 [shape = 's32[1]{0}', space=sflag, size = 0x4, scoped, tag = 'scoped memory for tpu_custom_call.1']
    #allocation10 [shape = 'u8[4096]{0}', space=vmem, size = 0x1000, scoped, tag = 'output window, operand 2, single buffered']
    #allocation11 [shape = 'u8[4096]{0}', space=vmem, size = 0x1000, scoped, tag = 'output window, operand 3, single buffered']
    #allocation12 [shape = 's32[1]{0}', space=sflag, size = 0x4, scoped, tag = 'scoped memory for tpu_custom_call.1']
    %11 = vsyncpa [#allocation3], 0
    %12 = vsyncpa [#allocation6], 0
    %13 = vsyncpa [#allocation4], 0
    %14 = vsyncpa [#allocation9], 0
    %15 = vsyncpa [#allocation12], 0
    // Predicated region
    $region2: #{tpu_custom_call.1} parent=1 // pred_check
      _
    $region3: #{tpu_custom_call.1} parent=1 // pred_check_branch
      %17 = sbr.rel (0) target = $region5
    $region4: #{tpu_custom_call.1} parent=1 // pred_region
      %s18 = sadd.s32 0, 0
      %s19 = smul.u32 2, %s18
      %s21 = ssub.s32 256, 256
      %22 = vsyncadd [#allocation3], %s21
      %s23 = smul.addr %s19, 128
      %s24 = scalar_lea.hbm %s0, %s23
      %s25 = sshll.u32 [#allocation2], 4
      %s26 = int_to_ptr.vmem [resolvable:$true] %s25
      %31 = dma.hbm_to_vmem [thread:$0]  %s24, 256, %s26, [#allocation3], 128, 128, 8
    $region5: #{tpu_custom_call.1} parent=1 // pred_fallthru
      _
    // Predicated region
    $region6: #{tpu_custom_call.1} parent=1 // pred_check
      _
    $region7: #{tpu_custom_call.1} parent=1 // pred_check_branch
      %33 = sbr.rel (0) target = $region9
    $region8: #{tpu_custom_call.1} parent=1 // pred_region
      %s34 = sadd.s32 0, 0
      %s35 = smul.u32 2, %s34
      %s37 = ssub.s32 256, 256
      %38 = vsyncadd [#allocation6], %s37
      %s39 = smul.addr %s35, 128
      %s40 = scalar_lea.hbm %s1, %s39
      %s41 = sshll.u32 [#allocation5], 4
      %s42 = int_to_ptr.vmem [resolvable:$true] %s41
      %47 = dma.hbm_to_vmem [thread:$0]  %s40, 256, %s42, [#allocation6], 128, 128, 8
    $region9: #{tpu_custom_call.1} parent=1 // pred_fallthru
      _
    // Predicated region
    $region10: #{tpu_custom_call.1} parent=1 // pred_check
      _
    $region11: #{tpu_custom_call.1} parent=1 // pred_check_branch
      %49 = sbr.rel (0) target = $region13
    $region12: #{tpu_custom_call.1} parent=1 // pred_region
      %50 = dma.done [#allocation3], 256
    $region13: #{tpu_custom_call.1} parent=1 // pred_fallthru
      _
    // Predicated region
    $region14: #{tpu_custom_call.1} parent=1 // pred_check
      _
    $region15: #{tpu_custom_call.1} parent=1 // pred_check_branch
      %52 = sbr.rel (0) target = $region17
    $region16: #{tpu_custom_call.1} parent=1 // pred_region
      %53 = dma.done [#allocation6], 256
    $region17: #{tpu_custom_call.1} parent=1 // pred_fallthru
      _
    %s54 = sadd.s32 0, 0
    %s55 = smul.u32 2, %s54
    %s56 = sadd.s32 0, 0
    %s57 = smul.u32 2, %s56
    %p58 = scmp.eq.s32.totalorder 0, 0
    // Predicated region
    $region18: #{tpu_custom_call.1} parent=1 // pred_check
      %p59 = pneg %p58
    $region19: #{tpu_custom_call.1} parent=1 // pred_check_branch
      %61 = sbr.rel (%p59) target = $region21
    $region20: #{tpu_custom_call.1} parent=1 // pred_region
      %62 = vst [vmem:[#allocation7] sm:$0xff] 0.0
      %63 = vst [vmem:[#allocation8] sm:$0xff] 0.0
      %64 = vst [vmem:[#allocation10] sm:$0xff] 0.0
      %65 = vst [vmem:[#allocation11] sm:$0xff] 0.0
    $region21: #{tpu_custom_call.1} parent=1 // pred_fallthru
      _
    %v66 = vld [vmem:[#allocation2] sm:$0xff]
    %v67 = vld [vmem:[#allocation2 + $0x8] sm:$0xff]
    %v68 = vld [vmem:[#allocation5] sm:$0xff]
    %v69 = vld [vmem:[#allocation5 + $0x8] sm:$0xff]
    %v70 = vand.u32 2147483647, %v66
    %v71 = vand.u32 2147483647, %v67
    %v72 = vsub.f32 0.0, %v70
    %v73 = vsub.f32 0.0, %v71
    %v74 = vmul.f32 %v72, 1.442695
    %v75 = vpow.pop %v74
    %v76 = vmul.f32 %v73, 1.442695
    %v77 = vpow.pop %v76
    %vm78 = vcmp.ge.f32.partialorder %v66, 0.0
    %vm79 = vcmp.ge.f32.partialorder %v67, 0.0
    %v80 = vsel %vm78, 1.0, %v75
    %v81 = vsel %vm79, 1.0, %v77
    %v82 = vadd.f32 %v75, 1.0
    %v83 = vadd.f32 %v77, 1.0
    %v84 = vrcp.pop %v82
    %v85 = vrcp.pop %v83
    %v86 = vmul.f32 %v80, %v84
    %v87 = vmul.f32 %v81, %v85
    %v88 = vmax.f32 %v66, 0.0
    %v89 = vmax.f32 %v67, 0.0
    %v90 = vadd.f32 %v75, 1.0
    %v91 = vlog2.pop %v90
    %v92 = vmul.f32 %v91, 0.6931472
    %v93 = vmul.f32 -0.5, %v75
    %v94 = vadd.f32 %v93, 1.0
    %v95 = vmul.f32 %v94, %v75
    %v96 = vand.u32 2147483647, %v75
    %vm97 = vcmp.lt.f32.partialorder %v96, 0.0004427343
    %v98 = vsel %vm97, %v95, %v92
    %v99 = vadd.f32 %v77, 1.0
    %v100 = vlog2.pop %v99
    %v101 = vmul.f32 %v100, 0.6931472
    %v102 = vmul.f32 -0.5, %v77
    %v103 = vadd.f32 %v102, 1.0
    %v104 = vmul.f32 %v103, %v77
    %v105 = vand.u32 2147483647, %v77
    %vm106 = vcmp.lt.f32.partialorder %v105, 0.0004427343
    %v107 = vsel %vm106, %v104, %v101
    %v108 = vadd.f32 %v88, %v98
    %v109 = vadd.f32 %v89, %v107
    %v110 = vmul.f32 %v68, %v66
    %v111 = vmul.f32 %v69, %v67
    %v112 = vsub.f32 %v108, %v110
    %v113 = vsub.f32 %v109, %v111
    %v114 = vld [vmem:[#allocation7] sm:$0xff]
    %v115 = vmul.f32 %v86, %v68
    %v116 = vmul.f32 %v87, %v69
    %v117 = vadd.f32 %v115, %v116
    %v118 = vadd.f32 %v114, %v117
    %119 = vst [vmem:[#allocation7] sm:$0xff] %v118
    %v120 = vld [vmem:[#allocation8] sm:$0xff]
    %v121 = vadd.f32 %v86, %v87
    %v122 = vadd.f32 %v120, %v121
    %123 = vst [vmem:[#allocation8] sm:$0xff] %v122
    %v124 = vld [vmem:[#allocation10] sm:$0xff]
    %v125 = vadd.f32 %v68, %v69
    %v126 = vadd.f32 %v124, %v125
    %127 = vst [vmem:[#allocation10] sm:$0xff] %v126
    %v128 = vld [vmem:[#allocation11] sm:$0xff]
    %v129 = vadd.f32 %v112, %v113
    %v130 = vadd.f32 %v128, %v129
    %131 = vst [vmem:[#allocation11] sm:$0xff] %v130
    // Predicated region
    $region22: #{tpu_custom_call.1} parent=1 // pred_check
      _
    $region23: #{tpu_custom_call.1} parent=1 // pred_check_branch
      %133 = sbr.rel (0) target = $region25
    $region24: #{tpu_custom_call.1} parent=1 // pred_region
      %s135 = ssub.s32 128, 128
      %136 = vsyncadd [#allocation4], %s135
      %s138 = sshll.u32 [#allocation7], 4
      %s139 = int_to_ptr.vmem [resolvable:$true] %s138
      %141 = dma.vmem_to_hbm [thread:$0]  %s139, 128, %s2, [#allocation4]
    $region25: #{tpu_custom_call.1} parent=1 // pred_fallthru
      _
    // Predicated region
    $region26: #{tpu_custom_call.1} parent=1 // pred_check
      _
    $region27: #{tpu_custom_call.1} parent=1 // pred_check_branch
      %143 = sbr.rel (0) target = $region29
    $region28: #{tpu_custom_call.1} parent=1 // pred_region
      %s145 = ssub.s32 128, 128
      %146 = vsyncadd [#allocation9], %s145
      %s148 = sshll.u32 [#allocation8], 4
      %s149 = int_to_ptr.vmem [resolvable:$true] %s148
      %151 = dma.vmem_to_hbm [thread:$0]  %s149, 128, %s3, [#allocation9]
    $region29: #{tpu_custom_call.1} parent=1 // pred_fallthru
      _
    // Predicated region
    $region30: #{tpu_custom_call.1} parent=1 // pred_check
      _
    $region31: #{tpu_custom_call.1} parent=1 // pred_check_branch
      %153 = sbr.rel (0) target = $region33
    $region32: #{tpu_custom_call.1} parent=1 // pred_region
      %s155 = ssub.s32 128, 128
      %156 = vsyncadd [#allocation9], %s155
      %s158 = sshll.u32 [#allocation10], 4
      %s159 = int_to_ptr.vmem [resolvable:$true] %s158
      %161 = dma.vmem_to_hbm [thread:$0]  %s159, 128, %s4, [#allocation9]
    $region33: #{tpu_custom_call.1} parent=1 // pred_fallthru
      _
    // Predicated region
    $region34: #{tpu_custom_call.1} parent=1 // pred_check
      _
    $region35: #{tpu_custom_call.1} parent=1 // pred_check_branch
      %163 = sbr.rel (0) target = $region37
    $region36: #{tpu_custom_call.1} parent=1 // pred_region
      %s165 = ssub.s32 128, 128
      %166 = vsyncadd [#allocation12], %s165
      %s168 = sshll.u32 [#allocation11], 4
      %s169 = int_to_ptr.vmem [resolvable:$true] %s168
      %171 = dma.vmem_to_hbm [thread:$0]  %s169, 128, %s5, [#allocation12]
    $region37: #{tpu_custom_call.1} parent=1 // pred_fallthru
      _
    // Predicated region
    $region38: #{tpu_custom_call.1} parent=1 // pred_check
      _
    $region39: #{tpu_custom_call.1} parent=1 // pred_check_branch
      %173 = sbr.rel (0) target = $region41
    $region40: #{tpu_custom_call.1} parent=1 // pred_region
      %174 = dma.done [#allocation4], 128
    $region41: #{tpu_custom_call.1} parent=1 // pred_fallthru
      _
    // Predicated region
    $region42: #{tpu_custom_call.1} parent=1 // pred_check
      _
    $region43: #{tpu_custom_call.1} parent=1 // pred_check_branch
      %176 = sbr.rel (0) target = $region45
    $region44: #{tpu_custom_call.1} parent=1 // pred_region
      %177 = dma.done [#allocation9], 128
    $region45: #{tpu_custom_call.1} parent=1 // pred_fallthru
      _
    // Predicated region
    $region46: #{tpu_custom_call.1} parent=1 // pred_check
      _
    $region47: #{tpu_custom_call.1} parent=1 // pred_check_branch
      %179 = sbr.rel (0) target = $region49
    $region48: #{tpu_custom_call.1} parent=1 // pred_region
      %180 = dma.done [#allocation9], 128
    $region49: #{tpu_custom_call.1} parent=1 // pred_fallthru
      _
    // Predicated region
    $region50: #{tpu_custom_call.1} parent=1 // pred_check
      _
    $region51: #{tpu_custom_call.1} parent=1 // pred_check_branch
      %182 = sbr.rel (0) target = $region53
    $region52: #{tpu_custom_call.1} parent=1 // pred_region
      %183 = dma.done [#allocation12], 128
    $region53: #{tpu_custom_call.1} parent=1 // pred_fallthru
      _
    %184 = vsyncpa [#allocation3], 1
    %185 = vsyncpa [#allocation6], 1
    %186 = vsyncpa [#allocation4], 1
    %187 = vsyncpa [#allocation9], 1
    %188 = vsyncpa [#allocation12], 1

</llo_original>
